<compile_context>
chip_gen: v6e
topology: v6e:2x2x1
jax: 0.10.0
libtpu: 0.0.40
codegen_flags: <defaults>
</compile_context>

<pallas_src>
import functools

import jax
import jax.numpy as jnp
from jax.experimental import pallas as pl
from jax.experimental.pallas import tpu as pltpu


def _round_up(x, m):
    return ((x + m - 1) // m) * m


def _tpu_generation():
    """Best-effort TPU generation tag ('v4', 'v5', 'v6', 'v7') or None."""
    try:
        kind = jax.devices()[0].device_kind.lower()
    except Exception:  # no devices / exotic backend -> conservative defaults
        return None
    for tag in ("v7", "v6", "v5", "v4"):
        if tag in kind:
            return tag
    return None


# Per-generation tuning: per-input block budget, scoped-VMEM limit, whether to
# split the batch across TensorCores (v7x has 2 TCs; v5e/v6e have 1).
_GEN_CFG = {
    "v7": dict(block_bytes=7 << 20, vmem_limit=46 << 20, max_splits=2,
               core_parallel=True),
    "v6": dict(block_bytes=6 << 20, vmem_limit=64 << 20, max_splits=1,
               core_parallel=False),
    "v5": dict(block_bytes=2 << 20, vmem_limit=16 << 20, max_splits=1,
               core_parallel=False),
    "v4": dict(block_bytes=2 << 20, vmem_limit=16 << 20, max_splits=1,
               core_parallel=False),
    None: dict(block_bytes=2 << 20, vmem_limit=32 << 20, max_splits=1,
               core_parallel=False),
}


def _mse_kernel(y_ref, yp_ref, o_ref, *, n_rows, n_cols, tile_rows, tile_cols,
                tiles_per_split, row_mask, col_mask, first_masked_row_tile):
    """Fold (y - y_pred)^2 of one block into an (8, tile_cols) f32 accumulator.

    Grid = (num_splits, d_tiles, tiles_per_split); the row-tile axis (last) is
    the reduction axis, so the output block index depends only on (split, dj)
    and stays VMEM-resident across it (accumulator pattern).  The fold is pure
    VPU work -- no per-step cross-lane reduce, no per-step HBM writeback.
    """
    c = pl.program_id(0)   # batch split (CORE_PARALLEL on v7x)
    dj = pl.program_id(1)  # feature tile
    i = pl.program_id(2)   # row tile (reduction axis)

    @pl.when(i == 0)
    def _():
        o_ref[...] = jnp.zeros_like(o_ref)

    diff = y_ref[...].astype(jnp.float32) - yp_ref[...].astype(jnp.float32)
    sq = diff * diff

    def _fold_accumulate(vals):
        # (tile_rows, C) -> (tile_rows//8, 8, C): splits the sublane axis into
        # vreg-aligned groups; summing the leading (untiled) axis is a chain of
        # element-wise vreg adds on the VPU.
        o_ref[...] += vals.reshape(tile_rows // 8, 8, tile_cols).sum(axis=0)

    if not (row_mask or col_mask):
        _fold_accumulate(sq)
        return

    # Masking is only required on edge / padded tiles; gate it with pl.when so
    # steady-state steps stay at cast/sub/mul/add.
    tile_idx = c * tiles_per_split + i
    needs = jnp.bool_(False)
    if row_mask:
        needs = jnp.logical_or(needs, tile_idx >= first_masked_row_tile)
    if col_mask:
        needs = jnp.logical_or(needs, dj == pl.num_programs(1) - 1)

    @pl.when(jnp.logical_not(needs))
    def _():
        _fold_accumulate(sq)

    @pl.when(needs)
    def _():
        masked = sq
        if row_mask:
            # Row index from the *unclamped* tile index: padded tiles of the
            # last split (which re-read a valid block via the clamped
            # index_map) get fully zeroed here.
            row = tile_idx * tile_rows + jax.lax.broadcasted_iota(
                jnp.int32, sq.shape, 0)
            masked = jnp.where(row < n_rows, masked, 0.0)
        if col_mask:
            col = dj * tile_cols + jax.lax.broadcasted_iota(
                jnp.int32, sq.shape, 1)
            masked = jnp.where(col < n_cols, masked, 0.0)
        _fold_accumulate(masked)


def loss_mse(y_pred, y, x_pred=None, x=None, *, tile_rows=None, num_splits=None):
    """Pallas equivalent of Loss_MSE.forward (x_pred, x intentionally unused)."""
    del x_pred, x  # unused, matching the PyTorch module
    y = jnp.asarray(y)
    y_pred = jnp.asarray(y_pred)
    assert y.shape == y_pred.shape and y.ndim == 2
    n, d = y.shape

    gen = _tpu_generation()
    cfg = _GEN_CFG.get(gen, _GEN_CFG[None])

    itemsize = max(jnp.dtype(y.dtype).itemsize, jnp.dtype(y_pred.dtype).itemsize)
    # Sublane packing multiple: 8 for f32, 16 for bf16, 32 for int8/fp8.
    sub = max(8, 32 // min(jnp.dtype(y.dtype).itemsize,
                           jnp.dtype(y_pred.dtype).itemsize))

    target_block_bytes = cfg["block_bytes"]

    if tile_rows is not None:
        # Explicit override (testing / tuning): sublane-align it, full-D rows.
        tile_rows = min(_round_up(max(int(tile_rows), 1), sub), _round_up(n, sub))
        tile_cols = d
    elif sub * d * itemsize <= target_block_bytes:
        # Common case: full rows fit the budget -> tile the batch axis only.
        tile_cols = d
        rows_fit = max(sub, (target_block_bytes // (d * itemsize)) // sub * sub)
        tile_rows = min(_round_up(n, sub), rows_fit)
    else:
        # Very large D: tile the feature axis with 128-multiple blocks so the
        # double-buffered footprint stays inside every generation's VMEM.
        tile_cols = max(128,
                        (target_block_bytes // (sub * itemsize)) // 128 * 128)
        tile_rows = sub

    num_row_tiles = pl.cdiv(n, tile_rows)
    d_tiles = pl.cdiv(d, tile_cols)

    if num_splits is None:
        # Split only on multi-TensorCore chips (v7x) and only with enough work.
        num_splits = cfg["max_splits"] if num_row_tiles >= 8 else 1
    num_splits = max(1, min(int(num_splits), num_row_tiles))
    tiles_per_split = pl.cdiv(num_row_tiles, num_splits)

    ragged_rows = (n % tile_rows) != 0
    padded_tiles = num_splits * tiles_per_split > num_row_tiles
    row_mask = ragged_rows or padded_tiles
    first_masked_row_tile = num_row_tiles - 1 if ragged_rows else num_row_tiles
    col_mask = d_tiles > 1 and (d % tile_cols) != 0

    last_row_tile = num_row_tiles - 1

    def in_map(c, dj, i):
        # Clamp so padded (fully out-of-range) tiles of the last split re-read
        # a valid block; their contribution is masked to zero in the kernel.
        t = jnp.minimum(c * tiles_per_split + i, last_row_tile)
        return (t, dj)

    def out_map(c, dj, i):
        return (c, dj)

    kernel = functools.partial(
        _mse_kernel,
        n_rows=n, n_cols=d,
        tile_rows=tile_rows, tile_cols=tile_cols,
        tiles_per_split=tiles_per_split,
        row_mask=row_mask, col_mask=col_mask,
        first_masked_row_tile=first_masked_row_tile,
    )

    # Scoped VMEM: 2 inputs x 2 pipeline buffers x block + small output block,
    # floored at the generation's suggested limit (46 MiB v7x / 64 MiB v6e /
    # 16 MiB v5e).
    needed = 4 * tile_rows * tile_cols * itemsize + 2 * 8 * tile_cols * 4
    vmem_limit = int(max(cfg["vmem_limit"], needed + (4 << 20)))

    split_sem = (pltpu.CORE_PARALLEL
                 if (cfg["core_parallel"] and num_splits == 2)
                 else pltpu.ARBITRARY)

    # TODO(synk): optionally sweep pipeline_mode=pl.Buffered(3) on the input
    # BlockSpecs for small-block (v5e / tiny-N) configurations.
    partial = pl.pallas_call(
        kernel,
        out_shape=jax.ShapeDtypeStruct((num_splits * 8, d), jnp.float32),
        grid_spec=pltpu.PrefetchScalarGridSpec(
            num_scalar_prefetch=0,
            grid=(num_splits, d_tiles, tiles_per_split),
            in_specs=[
                pl.BlockSpec((tile_rows, tile_cols), in_map),
                pl.BlockSpec((tile_rows, tile_cols), in_map),
            ],
            # Output block index is independent of the row-tile (reduction)
            # axis, so the (8, tile_cols) accumulator stays VMEM-resident.
            out_specs=pl.BlockSpec((8, tile_cols), out_map),
        ),
        compiler_params=pltpu.CompilerParams(
            dimension_semantics=(split_sem, pltpu.ARBITRARY, pltpu.ARBITRARY),
            vmem_limit_bytes=vmem_limit,
        ),
    )(y, y_pred)

    # Tiny final reduction (num_splits*8 x d, f32) + mean over the batch.
    return jnp.sum(partial) / n


if __name__ == "__main__":
    key = jax.random.PRNGKey(0)

    # --- Test 1: small shapes matching the module's 2-D convention ----------
    k1, k2, k3, k4 = jax.random.split(key, 4)
    N, D = 8, 32
    y_pred = jax.random.normal(k1, (N, D), dtype=jnp.float32)
    y = jax.random.normal(k2, (N, D), dtype=jnp.float32)
    x_pred = jax.random.normal(k3, (N, D), dtype=jnp.float32)  # unused by fwd
    x = jax.random.normal(k4, (N, D), dtype=jnp.float32)       # unused by fwd

    loss = jax.block_until_ready(loss_mse(y_pred, y, x_pred, x))
    ref = jnp.mean(jnp.sum((y - y_pred) ** 2, axis=1))
    assert jnp.allclose(loss, ref, rtol=1e-6, atol=1e-6), (loss, ref)

    # --- Test 2: exercise tiled / masked / multi-split (ragged N) path ------
    k5, k6 = jax.random.split(k1)
    N2, D2 = 1000, 256  # not a multiple of the tile -> last-tile row mask
    y_pred2 = jax.random.normal(k5, (N2, D2), dtype=jnp.float32)
    y2 = jax.random.normal(k6, (N2, D2), dtype=jnp.float32)

    loss2 = jax.block_until_ready(
        loss_mse(y_pred2, y2, None, None, tile_rows=128, num_splits=2))
    ref2 = jnp.mean(jnp.sum((y2 - y_pred2) ** 2, axis=1))
    assert jnp.allclose(loss2, ref2, rtol=1e-4, atol=1e-4), (loss2, ref2)

    print("KERNEL_OK")
</pallas_src>

<mosaic_0001>
module attributes {stable_mosaic.version = 11 : i64} {
  func.func @_mse_kernel(%arg0: i32, %arg1: i32, %arg2: i32, %arg3: memref<8x32xf32, #tpu.memory_space<vmem>>, %arg4: memref<8x32xf32, #tpu.memory_space<vmem>>, %arg5: memref<8x32xf32, #tpu.memory_space<vmem>>) attributes {dimension_semantics = [#tpu.dimension_semantics<arbitrary>, #tpu.dimension_semantics<arbitrary>, #tpu.dimension_semantics<arbitrary>], iteration_bounds = array<i64: 1, 1, 1>, scalar_prefetch = 0 : i64, scratch_operands = 0 : i64, tpu.core_type = #tpu.core_type<tc>, window_params = [{transform_indices = @transform_0, window_bounds = array<i64: 8, 32>}, {transform_indices = @transform_1, window_bounds = array<i64: 8, 32>}, {transform_indices = @transform_2, window_bounds = array<i64: 8, 32>}]} {
    %c0_i32 = arith.constant 0 : i32
    %0 = arith.cmpi eq, %arg2, %c0_i32 : i32
    %1 = arith.extui %0 : i1 to i32
    %c0_i32_0 = arith.constant 0 : i32
    %2 = arith.cmpi ne, %1, %c0_i32_0 : i32
    scf.if %2 {
      %cst_8 = arith.constant 0.000000e+00 : f32
      %12 = vector.broadcast %cst_8 : f32 to vector<8x32xf32>
      %c0_9 = arith.constant 0 : index
      %c0_10 = arith.constant 0 : index
      %13 = vector.load %arg5[%c0_9, %c0_10] : memref<8x32xf32, #tpu.memory_space<vmem>>, vector<8x32xf32>
      tpu.vector_store %arg5[%c0_9, %c0_10], %12 {strides = array<i32>} : memref<8x32xf32, #tpu.memory_space<vmem>>, vector<8x32xf32>,
    } else {
    }
    %c0 = arith.constant 0 : index
    %c0_1 = arith.constant 0 : index
    %3 = vector.load %arg3[%c0, %c0_1] : memref<8x32xf32, #tpu.memory_space<vmem>>, vector<8x32xf32>
    %c0_2 = arith.constant 0 : index
    %c0_3 = arith.constant 0 : index
    %4 = vector.load %arg4[%c0_2, %c0_3] : memref<8x32xf32, #tpu.memory_space<vmem>>, vector<8x32xf32>
    %5 = arith.subf %3, %4 : vector<8x32xf32>
    %6 = arith.mulf %5, %5 : vector<8x32xf32>
    %c0_4 = arith.constant 0 : index
    %c0_5 = arith.constant 0 : index
    %7 = vector.load %arg5[%c0_4, %c0_5] : memref<8x32xf32, #tpu.memory_space<vmem>>, vector<8x32xf32>
    %8 = vector.shape_cast %6 : vector<8x32xf32> to vector<1x8x32xf32>
    %cst = arith.constant dense<0.000000e+00> : vector<8x32xf32>
    %9 = vector.multi_reduction <add>, %8, %cst [0] : vector<1x8x32xf32> to vector<8x32xf32>
    %10 = arith.addf %7, %9 : vector<8x32xf32>
    %c0_6 = arith.constant 0 : index
    %c0_7 = arith.constant 0 : index
    %11 = vector.load %arg5[%c0_6, %c0_7] : memref<8x32xf32, #tpu.memory_space<vmem>>, vector<8x32xf32>
    tpu.vector_store %arg5[%c0_6, %c0_7], %10 {strides = array<i32>} : memref<8x32xf32, #tpu.memory_space<vmem>>, vector<8x32xf32>,
    return
  }
  func.func @transform_0(%arg0: i32, %arg1: i32, %arg2: i32) -> (i32, i32) {
    %c1_i32 = arith.constant 1 : i32
    %0 = arith.muli %arg0, %c1_i32 : i32
    %1 = arith.addi %0, %arg2 : i32
    %c0_i32 = arith.constant 0 : i32
    %2 = arith.minsi %1, %c0_i32 : i32
    %c0_i32_0 = arith.constant 0 : i32
    return %2, %arg1 : i32, i32
  }
  func.func @transform_1(%arg0: i32, %arg1: i32, %arg2: i32) -> (i32, i32) {
    %c1_i32 = arith.constant 1 : i32
    %0 = arith.muli %arg0, %c1_i32 : i32
    %1 = arith.addi %0, %arg2 : i32
    %c0_i32 = arith.constant 0 : i32
    %2 = arith.minsi %1, %c0_i32 : i32
    %c0_i32_0 = arith.constant 0 : i32
    return %2, %arg1 : i32, i32
  }
  func.func @transform_2(%arg0: i32, %arg1: i32, %arg2: i32) -> (i32, i32) {
    %c0_i32 = arith.constant 0 : i32
    return %arg0, %arg1 : i32, i32
  }
}

</mosaic_0001>

<llo_original>
// kernel: tpu_custom_call.1
$region0: #{tpu_custom_call.1}
  #allocation0 [shape = 'u32[]', space=smem, size = 0x4, offset = 0x4, fixed_abs, tag = 'smem constant byte address 0x4 - core index']
  #allocation1 [shape = 'u32[144,128]{1,0:T(1,128)}', space=vmem, size = 0x12000, scoped, tag = 'internal scratch']
  %s0 = inlined_call_operand.hbm [shape: f32[8,32], index: 0, kind: input, shape index: {}]
  %s1 = inlined_call_operand.hbm [shape: f32[8,32], index: 1, kind: input, shape index: {}]
  %s2 = inlined_call_operand.hbm [shape: f32[8,32], index: 2, kind: output, shape index: {}]
  %s3 = sld [smem:[#allocation0]]
  $region30: #{tpu_custom_call.1} parent=0
    _
  %s5 = ssub.s32 1, %s3
  %s6 = scalar_select 0, %s5, %s3
  $region1: #{tpu_custom_call.1} parent=0
    #allocation2 [shape = 'u8[4096]{0}', space=vmem, size = 0x1000, scoped, tag = 'input window, operand 0, single buffered']
    #allocation3 [shape = 's32[1]{0}', space=sflag, size = 0x4, scoped, tag = 'scoped memory for tpu_custom_call.1']
    #allocation4 [shape = 's32[1]{0}', space=sflag, size = 0x4, scoped, tag = 'scoped memory for tpu_custom_call.1']
    #allocation5 [shape = 'u8[4096]{0}', space=vmem, size = 0x1000, scoped, tag = 'input window, operand 1, single buffered']
    #allocation6 [shape = 's32[1]{0}', space=sflag, size = 0x4, scoped, tag = 'scoped memory for tpu_custom_call.1']
    #allocation7 [shape = 'u8[4096]{0}', space=vmem, size = 0x1000, scoped, tag = 'output window, operand 0, single buffered']
    %7 = vsyncpa [#allocation3], 0
    %8 = vsyncpa [#allocation6], 0
    %9 = vsyncpa [#allocation4], 0
    // Predicated region
    $region2: #{tpu_custom_call.1} parent=1 // pred_check
      _
    $region3: #{tpu_custom_call.1} parent=1 // pred_check_branch
      %11 = sbr.rel (0) target = $region5
    $region4: #{tpu_custom_call.1} parent=1 // pred_region
      %s12 = sadd.s32 0, 0
      %p13 = scmp.lt.s32.totalorder %s12, 0
      %s14 = scalar_select %p13, %s12, 0
      %s16 = ssub.s32 128, 128
      %17 = vsyncadd [#allocation3], %s16
      %s18 = smul.addr %s14, 128
      %s19 = scalar_lea.hbm %s0, %s18
      %s21 = sshll.u32 [#allocation2], 4
      %s22 = int_to_ptr.vmem [resolvable:$true] %s21
      %24 = dma.hbm_to_vmem [thread:$0]  %s19, 128, %s22, [#allocation3]
    $region5: #{tpu_custom_call.1} parent=1 // pred_fallthru
      _
    // Predicated region
    $region6: #{tpu_custom_call.1} parent=1 // pred_check
      _
    $region7: #{tpu_custom_call.1} parent=1 // pred_check_branch
      %26 = sbr.rel (0) target = $region9
    $region8: #{tpu_custom_call.1} parent=1 // pred_region
      %s27 = sadd.s32 0, 0
      %p28 = scmp.lt.s32.totalorder %s27, 0
      %s29 = scalar_select %p28, %s27, 0
      %s31 = ssub.s32 128, 128
      %32 = vsyncadd [#allocation6], %s31
      %s33 = smul.addr %s29, 128
      %s34 = scalar_lea.hbm %s1, %s33
      %s36 = sshll.u32 [#allocation5], 4
      %s37 = int_to_ptr.vmem [resolvable:$true] %s36
      %39 = dma.hbm_to_vmem [thread:$0]  %s34, 128, %s37, [#allocation6]
    $region9: #{tpu_custom_call.1} parent=1 // pred_fallthru
      _
    // Predicated region
    $region10: #{tpu_custom_call.1} parent=1 // pred_check
      _
    $region11: #{tpu_custom_call.1} parent=1 // pred_check_branch
      %41 = sbr.rel (0) target = $region13
    $region12: #{tpu_custom_call.1} parent=1 // pred_region
      %42 = dma.done [#allocation3], 128
    $region13: #{tpu_custom_call.1} parent=1 // pred_fallthru
      _
    // Predicated region
    $region14: #{tpu_custom_call.1} parent=1 // pred_check
      _
    $region15: #{tpu_custom_call.1} parent=1 // pred_check_branch
      %44 = sbr.rel (0) target = $region17
    $region16: #{tpu_custom_call.1} parent=1 // pred_region
      %45 = dma.done [#allocation6], 128
    $region17: #{tpu_custom_call.1} parent=1 // pred_fallthru
      _
    %s46 = sadd.s32 0, 0
    %p47 = scmp.lt.s32.totalorder %s46, 0
    %s48 = scalar_select %p47, %s46, 0
    %s49 = sadd.s32 0, 0
    %p50 = scmp.lt.s32.totalorder %s49, 0
    %s51 = scalar_select %p50, %s49, 0
    %p52 = scmp.eq.s32.totalorder 0, 0
    // Predicated region
    $region18: #{tpu_custom_call.1} parent=1 // pred_check
      %p53 = pneg %p52
    $region19: #{tpu_custom_call.1} parent=1 // pred_check_branch
      %55 = sbr.rel (%p53) target = $region21
    $region20: #{tpu_custom_call.1} parent=1 // pred_region
      %vm56 = vcmask 261120
      %57 = vst.msk [vmem:[#allocation7] sm:$0xff] %vm56, 0.0
    $region21: #{tpu_custom_call.1} parent=1 // pred_fallthru
      _
    %v58 = vld [vmem:[#allocation2] sm:$0xff]
    %v59 = vld [vmem:[#allocation5] sm:$0xff]
    %v60 = vsub.f32 %v58, %v59
    %v61 = vmul.f32 %v60, %v60
    %v62 = vld [vmem:[#allocation7] sm:$0xff]
    %v63 = vadd.f32 %v61, 0.0
    %v64 = vadd.f32 %v62, %v63
    %vm65 = vcmask 261120
    %66 = vst.msk [vmem:[#allocation7] sm:$0xff] %vm65, %v64
    // Predicated region
    $region22: #{tpu_custom_call.1} parent=1 // pred_check
      _
    $region23: #{tpu_custom_call.1} parent=1 // pred_check_branch
      %68 = sbr.rel (0) target = $region25
    $region24: #{tpu_custom_call.1} parent=1 // pred_region
      %s70 = ssub.s32 128, 128
      %71 = vsyncadd [#allocation4], %s70
      %s73 = sshll.u32 [#allocation7], 4
      %s74 = int_to_ptr.vmem [resolvable:$true] %s73
      %76 = dma.vmem_to_hbm [thread:$0]  %s74, 128, %s2, [#allocation4]
    $region25: #{tpu_custom_call.1} parent=1 // pred_fallthru
      _
    // Predicated region
    $region26: #{tpu_custom_call.1} parent=1 // pred_check
      _
    $region27: #{tpu_custom_call.1} parent=1 // pred_check_branch
      %78 = sbr.rel (0) target = $region29
    $region28: #{tpu_custom_call.1} parent=1 // pred_region
      %79 = dma.done [#allocation4], 128
    $region29: #{tpu_custom_call.1} parent=1 // pred_fallthru
      _
    %80 = vsyncpa [#allocation3], 1
    %81 = vsyncpa [#allocation6], 1
    %82 = vsyncpa [#allocation4], 1

</llo_original>
